<compile_context>
chip_gen: v7x
topology: tpu7x:2x2x1
jax: 0.10.0
libtpu: 0.0.40
codegen_flags: <defaults>
</compile_context>

<pallas_src>
import jax
import jax.numpy as jnp
from jax import lax
from jax.experimental import pallas as pl
from jax.experimental.pallas import tpu as pltpu


def _decoder_kernel(x_ref, w_ref, b_ref, o_ref):
    # x_ref: (1, TT, H)   w_ref: (C, H)   b_ref: (C, 1)   o_ref: (1, C, TT)
    x = x_ref[0]                     # (TT, H)
    w = w_ref[...]                   # (C, H)
    # Contract H on both operands -> (C, TT): output is already "transposed".
    acc = lax.dot_general(
        w, x,
        dimension_numbers=(((1,), (1,)), ((), ())),
        preferred_element_type=jnp.float32,
    )
    acc = acc + b_ref[...]           # (C, 1) broadcasts over the TT columns
    o_ref[0] = acc.astype(o_ref.dtype)


def _pick_seq_tile(T: int) -> int:
    for tt in (512, 256, 128):
        if T % tt == 0:
            return tt
    return T  # full dim: always satisfies the (8,128)-or-full rule


def decoder_forward(encoder, weight, bias):
    """encoder: (B, T, H); weight: (C, H) (PyTorch nn.Linear layout); bias: (C,).

    Returns logits of shape (B, C, T), matching Decoder.forward.
    """
    B, T, H = encoder.shape
    C = weight.shape[0]

    TT = _pick_seq_tile(T)
    grid = (B, T // TT)

    b_col = bias.reshape(C, 1)       # bias as a column so it broadcasts over TT

    logits = pl.pallas_call(
        _decoder_kernel,
        out_shape=jax.ShapeDtypeStruct((B, C, T), encoder.dtype),
        grid=grid,
        in_specs=[
            # x tile: one batch element, TT sequence rows, full hidden dim.
            pl.BlockSpec((1, TT, H), lambda b, t: (b, t, 0)),
            # weight / bias: full arrays, resident across all grid steps.
            pl.BlockSpec((C, H), lambda b, t: (0, 0)),
            pl.BlockSpec((C, 1), lambda b, t: (0, 0)),
        ],
        # Output tile written directly in (B, C, T) layout -> transpose fused.
        out_specs=pl.BlockSpec((1, C, TT), lambda b, t: (b, 0, t)),
        compiler_params=pltpu.CompilerParams(
            dimension_semantics=("parallel", "parallel"),
        ),
    )(encoder, weight, b_col)

    return logits


def reference_forward(encoder, weight, bias):
    y = jnp.einsum("bth,ch->btc", encoder, weight) + bias
    return jnp.transpose(y, (0, 2, 1))


if __name__ == "__main__":
    # Small shapes: batch=2, seq=8, hidden=32, num_classes=16
    B, T, H, C = 2, 8, 32, 16

    key = jax.random.PRNGKey(0)
    k_x, k_w, k_b = jax.random.split(key, 3)

    encoder = jax.random.normal(k_x, (B, T, H), dtype=jnp.float32)
    # nn.Linear(hidden_size, num_classes): weight (C, H), bias (C,)
    weight = jax.random.normal(k_w, (C, H), dtype=jnp.float32) * 0.05
    bias = jax.random.normal(k_b, (C,), dtype=jnp.float32) * 0.05

    logits = decoder_forward(encoder, weight, bias)
    jax.block_until_ready(logits)

    ref = reference_forward(encoder, weight, bias)
    assert logits.shape == (B, C, T), logits.shape
    assert jnp.allclose(logits, ref, atol=1e-5, rtol=1e-5), "mismatch vs reference"

    print("KERNEL_OK")
</pallas_src>

<mosaic_0001>
module attributes {stable_mosaic.version = 11 : i64} {
  func.func @_decoder_kernel(%arg0: i32, %arg1: i32, %arg2: memref<1x8x32xf32, #tpu.memory_space<vmem>>, %arg3: memref<16x32xf32, #tpu.memory_space<vmem>>, %arg4: memref<16x1xf32, #tpu.memory_space<vmem>>, %arg5: memref<1x16x8xf32, #tpu.memory_space<vmem>>) attributes {dimension_semantics = [#tpu.dimension_semantics<parallel>, #tpu.dimension_semantics<parallel>], iteration_bounds = array<i64: 2, 1>, scalar_prefetch = 0 : i64, scratch_operands = 0 : i64, tpu.core_type = #tpu.core_type<tc>, window_params = [{transform_indices = @transform_0, window_bounds = array<i64: 1, 8, 32>}, {pipeline_mode = #tpu.pipeline_mode<synchronous>, transform_indices = @transform_1, window_bounds = array<i64: 16, 32>}, {pipeline_mode = #tpu.pipeline_mode<synchronous>, transform_indices = @transform_2, window_bounds = array<i64: 16, 1>}, {transform_indices = @transform_3, window_bounds = array<i64: 1, 16, 8>}]} {
    %c0 = arith.constant 0 : index
    %c0_0 = arith.constant 0 : index
    %c0_1 = arith.constant 0 : index
    %0 = vector.load %arg2[%c0, %c0_0, %c0_1] : memref<1x8x32xf32, #tpu.memory_space<vmem>>, vector<1x8x32xf32>
    %1 = vector.shape_cast %0 : vector<1x8x32xf32> to vector<8x32xf32>
    %c0_2 = arith.constant 0 : index
    %c0_3 = arith.constant 0 : index
    %2 = vector.load %arg3[%c0_2, %c0_3] : memref<16x32xf32, #tpu.memory_space<vmem>>, vector<16x32xf32>
    %cst = arith.constant dense<0.000000e+00> : vector<16x8xf32>
    %3 = tpu.matmul %2, %1, %cst {dimension_numbers = #tpu.dot_dimension_numbers<[1], [1], [0], [0], [0, 0, 1, 0], [], []>} : vector<16x32xf32>, vector<8x32xf32>, vector<16x8xf32> -> vector<16x8xf32>
    %c0_4 = arith.constant 0 : index
    %c0_5 = arith.constant 0 : index
    %4 = vector.load %arg4[%c0_4, %c0_5] : memref<16x1xf32, #tpu.memory_space<vmem>>, vector<16x1xf32>
    %5 = vector.broadcast %4 : vector<16x1xf32> to vector<16x8xf32>
    %6 = arith.addf %3, %5 : vector<16x8xf32>
    %c0_6 = arith.constant 0 : index
    %c0_7 = arith.constant 0 : index
    %c0_8 = arith.constant 0 : index
    %7 = vector.load %arg5[%c0_6, %c0_7, %c0_8] : memref<1x16x8xf32, #tpu.memory_space<vmem>>, vector<1x16x8xf32>
    %8 = vector.shape_cast %7 : vector<1x16x8xf32> to vector<16x8xf32>
    %9 = vector.shape_cast %6 : vector<16x8xf32> to vector<1x16x8xf32>
    tpu.vector_store %arg5[%c0_6, %c0_7, %c0_8], %9 {strides = array<i32>} : memref<1x16x8xf32, #tpu.memory_space<vmem>>, vector<1x16x8xf32>,
    return
  }
  func.func @transform_0(%arg0: i32, %arg1: i32) -> (i32, i32, i32) {
    %c0_i32 = arith.constant 0 : i32
    %c0_i32_0 = arith.constant 0 : i32
    return %arg0, %arg1, %c0_i32 : i32, i32, i32
  }
  func.func @transform_1(%arg0: i32, %arg1: i32) -> (i32, i32) {
    %c0_i32 = arith.constant 0 : i32
    %c0_i32_0 = arith.constant 0 : i32
    %c0_i32_1 = arith.constant 0 : i32
    return %c0_i32, %c0_i32_0 : i32, i32
  }
  func.func @transform_2(%arg0: i32, %arg1: i32) -> (i32, i32) {
    %c0_i32 = arith.constant 0 : i32
    %c0_i32_0 = arith.constant 0 : i32
    %c0_i32_1 = arith.constant 0 : i32
    return %c0_i32, %c0_i32_0 : i32, i32
  }
  func.func @transform_3(%arg0: i32, %arg1: i32) -> (i32, i32, i32) {
    %c0_i32 = arith.constant 0 : i32
    %c0_i32_0 = arith.constant 0 : i32
    return %arg0, %c0_i32, %arg1 : i32, i32, i32
  }
}

</mosaic_0001>

<llo_original>
// kernel: tpu_custom_call.1
$region0: #{tpu_custom_call.1}
  #allocation0 [shape = 'u32[]', space=smem, size = 0x4, offset = 0x4, fixed_abs, tag = 'smem constant byte address 0x4 - core index']
  #allocation1 [shape = 'u32[144,128]{1,0:T(1,128)}', space=vmem, size = 0x12000, scoped, tag = 'internal scratch']
  %s0 = inlined_call_operand.vmem [shape: f32[2,8,32], index: 0, kind: input, shape index: {}]
  %s1 = inlined_call_operand.hbm [shape: f32[16,32], index: 1, kind: input, shape index: {}]
  %s2 = inlined_call_operand.vmem [shape: f32[16,1], index: 2, kind: input, shape index: {}]
  %s3 = inlined_call_operand.vmem [shape: f32[2,16,8], index: 3, kind: output, shape index: {}]
  %s4 = sld [smem:[#allocation0]]
  $region49: #{tpu_custom_call.1} parent=0
    _
  %s6 = ssub.s32 1, %s4
  %s7 = scalar_select 0, %s6, %s4
  $region1: #{tpu_custom_call.1} parent=0
    #allocation2 [shape = 'u8[8192]{0}', space=vmem, size = 0x2000, scoped, tag = 'input window, operand 1, single buffered']
    #allocation3 [shape = 's32[2]{0}', space=sflag, size = 0x8, scoped, tag = 'scoped memory for tpu_custom_call.1']
    %8 = vsyncpa [#allocation3], 0
    loop: start=0, step=1, limit=4
    $region2: #{tpu_custom_call.1} parent=1 // loop_pre_header
      _
    $region3: #{tpu_custom_call.1} parent=1 // loop_header
      %s10 = sphi 0, %s14
      %p11 = scmp.ge.s32.totalorder %s10, 4
      %s17 = sphi 0, %s29
      %s18 = sphi 0, %s25
      %s19 = sphi 0, %s17
      %s20 = sphi 0, %s18
      %s21 = sphi 0, %s19
      %s22 = sphi 0, %s20
      %s34 = sphi 0, %s36
      %s37 = sphi 0, %s34
      %s38 = sphi 0, %s37
      %s54 = sphi 0, %s38
      %s58 = sphi 0, %s58
      %s60 = sphi 0, %s58
      %s61 = sphi 0, %s60
      %s75 = sphi 0, %s61
      %s79 = sphi 0, %s79
      %s81 = sphi 0, %s79
      %s82 = sphi 0, %s81
      %s96 = sphi 0, %s82
      %s104 = sphi 0, %s106
      %s107 = sphi 0, %s104
      %s108 = sphi 0, %s107
      %s124 = sphi 0, %s108
    $region4: #{tpu_custom_call.1} parent=1 // loop_header_branch
      %13 = sbr.rel (%p11) target = $region8
    $region5: #{tpu_custom_call.1} parent=1 // loop_body
      %s15 = ssub.s32 %s10, 1
      %s16 = ssub.s32 %s10, 2
      %s23 = sadd.s32 1, %s18
      %p24 = scmp.ge.s32.totalorder %s23, 1
      %s25 = scalar_select %p24, 0, %s23
      %s26 = sadd.s32 1, %s17
      %s27 = scalar_select %p24, %s26, %s17
      %p28 = scmp.ge.s32.totalorder %s27, 2
      %s29 = scalar_select %p28, 0, %s27
      %s30 = ssub.s32 %s17, %s29
      %s31 = ssub.s32 %s18, %s25
      %s32 = sor.u32 %s30, %s31
      %p33 = scmp.eq.s32.totalorder %s32, 0
      %s35 = sadd.s32 %s34, 1
      %s36 = scalar_select %p33, %s34, %s35
      %p39 = pneg %p33
      %p40 = scmp.eq.s32.totalorder %s10, 1
      %p41 = por %p39, %p40
      %p42 = scmp.ne.s32.totalorder %s34, %s37
      %p43 = scmp.eq.s32.totalorder %s10, 0
      %p44 = por %p42, %p43
      %p45 = scmp.ne.s32.totalorder %s34, %s37
      %p46 = scmp.eq.s32.totalorder %s15, 1
      %p47 = por %p45, %p46
      %p48 = scmp.ne.s32.totalorder %s37, %s38
      %p49 = scmp.eq.s32.totalorder %s15, 0
      %p50 = por %p48, %p49
      %p51 = scmp.ne.s32.totalorder %s37, %s38
      %p52 = scmp.eq.s32.totalorder %s16, 1
      %p53 = por %p51, %p52
      %p55 = scmp.ne.s32.totalorder %s38, %s54
      %p56 = scmp.eq.s32.totalorder %s16, 0
      %p57 = por %p55, %p56
      %s59 = sadd.s32 %s58, 1
      %p62 = scmp.eq.s32.totalorder %s10, 1
      %p63 = scmp.ne.s32.totalorder %s58, %s60
      %p64 = scmp.eq.s32.totalorder %s10, 0
      %p65 = por %p63, %p64
      %p66 = scmp.ne.s32.totalorder %s58, %s60
      %p67 = scmp.eq.s32.totalorder %s15, 1
      %p68 = por %p66, %p67
      %p69 = scmp.ne.s32.totalorder %s60, %s61
      %p70 = scmp.eq.s32.totalorder %s15, 0
      %p71 = por %p69, %p70
      %p72 = scmp.ne.s32.totalorder %s60, %s61
      %p73 = scmp.eq.s32.totalorder %s16, 1
      %p74 = por %p72, %p73
      %p76 = scmp.ne.s32.totalorder %s61, %s75
      %p77 = scmp.eq.s32.totalorder %s16, 0
      %p78 = por %p76, %p77
      %s80 = sadd.s32 %s79, 1
      %p83 = scmp.eq.s32.totalorder %s10, 1
      %p84 = scmp.ne.s32.totalorder %s79, %s81
      %p85 = scmp.eq.s32.totalorder %s10, 0
      %p86 = por %p84, %p85
      %p87 = scmp.ne.s32.totalorder %s79, %s81
      %p88 = scmp.eq.s32.totalorder %s15, 1
      %p89 = por %p87, %p88
      %p90 = scmp.ne.s32.totalorder %s81, %s82
      %p91 = scmp.eq.s32.totalorder %s15, 0
      %p92 = por %p90, %p91
      %p93 = scmp.ne.s32.totalorder %s81, %s82
      %p94 = scmp.eq.s32.totalorder %s16, 1
      %p95 = por %p93, %p94
      %p97 = scmp.ne.s32.totalorder %s82, %s96
      %p98 = scmp.eq.s32.totalorder %s16, 0
      %p99 = por %p97, %p98
      %s100 = ssub.s32 %s17, %s29
      %s101 = ssub.s32 %s18, %s25
      %s102 = sor.u32 %s100, %s101
      %p103 = scmp.eq.s32.totalorder %s102, 0
      %s105 = sadd.s32 %s104, 1
      %s106 = scalar_select %p103, %s104, %s105
      %p109 = pneg %p103
      %p110 = scmp.eq.s32.totalorder %s10, 1
      %p111 = por %p109, %p110
      %p112 = scmp.ne.s32.totalorder %s104, %s107
      %p113 = scmp.eq.s32.totalorder %s10, 0
      %p114 = por %p112, %p113
      %p115 = scmp.ne.s32.totalorder %s104, %s107
      %p116 = scmp.eq.s32.totalorder %s15, 1
      %p117 = por %p115, %p116
      %p118 = scmp.ne.s32.totalorder %s107, %s108
      %p119 = scmp.eq.s32.totalorder %s15, 0
      %p120 = por %p118, %p119
      %p121 = scmp.ne.s32.totalorder %s107, %s108
      %p122 = scmp.eq.s32.totalorder %s16, 1
      %p123 = por %p121, %p122
      %p125 = scmp.ne.s32.totalorder %s108, %s124
      %p126 = scmp.eq.s32.totalorder %s16, 0
      %p127 = por %p125, %p126
      %p128 = scmp.le.s32.totalorder 1, %s10
      %p129 = scmp.lt.s32.totalorder %s10, 3
      %p130 = pnand %p128, %p129
      %p131 = pneg %p130
      // Predicated region
      $region9: #{tpu_custom_call.1} parent=5 // pred_check
        _
      $region10: #{tpu_custom_call.1} parent=5 // pred_check_branch
        %133 = sbr.rel (%p130) target = $region12
      $region11: #{tpu_custom_call.1} parent=5 // pred_region
        %s134 = ssub.s32 %s10, 1
        // Predicated region
        $region13: #{tpu_custom_call.1} parent=11 // pred_check
          %p135 = pneg %p71
        $region14: #{tpu_custom_call.1} parent=11 // pred_check_branch
          %137 = sbr.rel (%p135) target = $region16
        $region15: #{tpu_custom_call.1} parent=11 // pred_region
          %s139 = ssub.s32 256, 256
          %140 = vsyncadd [#allocation3], %s139
          %s141 = sshll.u32 [#allocation2], 4
          %s142 = int_to_ptr.vmem [resolvable:$true] %s141
          %147 = dma.hbm_to_vmem [thread:$0]  %s1, 256, %s142, [#allocation3], 128, 128, 8
        $region16: #{tpu_custom_call.1} parent=11 // pred_fallthru
          _
        // Predicated region
        $region17: #{tpu_custom_call.1} parent=11 // pred_check
          %p148 = pneg %p92
        $region18: #{tpu_custom_call.1} parent=11 // pred_check_branch
          %150 = sbr.rel (%p148) target = $region20
        $region19: #{tpu_custom_call.1} parent=11 // pred_region
          _
        $region20: #{tpu_custom_call.1} parent=11 // pred_fallthru
          _
      $region12: #{tpu_custom_call.1} parent=5 // pred_fallthru
        _
      %p151 = scmp.lt.s32.totalorder %s10, 2
      // Predicated region
      $region21: #{tpu_custom_call.1} parent=5 // pred_check
        %p152 = pneg %p151
      $region22: #{tpu_custom_call.1} parent=5 // pred_check_branch
        %154 = sbr.rel (%p152) target = $region24
      $region23: #{tpu_custom_call.1} parent=5 // pred_region
        // Predicated region
        $region25: #{tpu_custom_call.1} parent=23 // pred_check
          %p155 = pneg %p44
        $region26: #{tpu_custom_call.1} parent=23 // pred_check_branch
          %157 = sbr.rel (%p155) target = $region28
        $region27: #{tpu_custom_call.1} parent=23 // pred_region
          %p158 = scmp.lt.s32.totalorder %s17, 1
          %s159 = scalar_select %p158, %s17, 1
          %p160 = scmp.lt.s32.totalorder %s18, 0
          %s161 = scalar_select %p160, %s18, 0
          %s162 = sadd.s32 %s161, %s159
          %s163 = smul.addr %s162, 8
          %s164 = scalar_lea.vmem %s0, %s163
        $region28: #{tpu_custom_call.1} parent=23 // pred_fallthru
          _
      $region24: #{tpu_custom_call.1} parent=5 // pred_fallthru
        _
      %p165 = scmp.le.s32.totalorder 1, %s10
      %p166 = scmp.lt.s32.totalorder %s10, 3
      %p167 = pnand %p165, %p166
      %p168 = pneg %p167
      // Predicated region
      $region29: #{tpu_custom_call.1} parent=5 // pred_check
        _
      $region30: #{tpu_custom_call.1} parent=5 // pred_check_branch
        %170 = sbr.rel (%p167) target = $region32
      $region31: #{tpu_custom_call.1} parent=5 // pred_region
        %s171 = ssub.s32 %s10, 1
        // Predicated region
        $region33: #{tpu_custom_call.1} parent=31 // pred_check
          %p172 = pneg %p71
        $region34: #{tpu_custom_call.1} parent=31 // pred_check_branch
          %174 = sbr.rel (%p172) target = $region36
        $region35: #{tpu_custom_call.1} parent=31 // pred_region
          %175 = dma.done [#allocation3], 256
        $region36: #{tpu_custom_call.1} parent=31 // pred_fallthru
          _
        %p176 = scmp.lt.s32.totalorder %s19, 1
        %s177 = scalar_select %p176, %s19, 1
        %p178 = scmp.lt.s32.totalorder %s20, 0
        %s179 = scalar_select %p178, %s20, 0
        %s180 = sadd.s32 %s179, %s177
        %s181 = smul.addr %s180, 8
        %s182 = scalar_lea.vmem %s0, %s181
        %p183 = pneg %p50
        %p184 = pneg %p47
        %p185 = pneg %p71
        %p186 = pneg %p68
        %p187 = pneg %p92
        %p188 = pneg %p89
        %p189 = pneg %p120
        %p190 = pneg %p117
        %p191 = scmp.lt.s32.totalorder %s19, 1
        %s192 = scalar_select %p191, %s19, 1
        %p193 = scmp.lt.s32.totalorder %s20, 0
        %s194 = scalar_select %p193, %s20, 0
        %s195 = smul.addr %s192, 2
        %s196 = sadd.s32 %s194, %s195
        %s197 = smul.addr %s196, 8
        %s198 = scalar_lea.vmem %s3, %s197
        %p199 = scmp.lt.s32.totalorder %s19, 1
        %s200 = scalar_select %p199, %s19, 1
        %p201 = scmp.lt.s32.totalorder %s20, 0
        %s202 = scalar_select %p201, %s20, 0
        %s203 = sadd.s32 %s202, %s200
        %s204 = smul.addr %s203, 8
        %s205 = scalar_lea.vmem %s0, %s204
        %p206 = scmp.lt.s32.totalorder %s19, 1
        %s207 = scalar_select %p206, %s19, 1
        %p208 = scmp.lt.s32.totalorder %s20, 0
        %s209 = scalar_select %p208, %s20, 0
        %s210 = smul.addr %s207, 2
        %s211 = sadd.s32 %s209, %s210
        %s212 = smul.addr %s211, 8
        %s213 = scalar_lea.vmem %s3, %s212
        %v214 = vld [vmem:[%s205] sm:$0xff]
        %v215 = vld [vmem:[#allocation2] sm:$0xff]
        %v216 = vld [vmem:[#allocation2 + $0x8] sm:$0xff]
        %v217 = vld [vmem:[%s2] sm:$0xff]
        %v218 = vld [vmem:[%s2 + $0x8] sm:$0xff]
        %220 = vset.pattern.permute.xlu0 0
        %221 = vperm.xlu0 %220, %v217
        %v222 = vpop.permute.xlu0 %221
        %225 = vset.pattern.permute.xlu0 0
        %226 = vperm.xlu0 %225, %v218
        %v227 = vpop.permute.xlu0 %226
        %vm229 = vcmask 261120
        %v231 = vsel %vm229, %v215, 0
        %v234 = vsel %vm229, %v216, 0
        %v237 = vsel %vm229, %v214, 0
        %239 = vmatprep.subr.mxu0 0.0
        %240 = vmatpush1.xpose.msra.mxu0 %v237
        %241 = vmatprep.subr.mxu0 0.0
        %242 = vmatpush1.xpose.msra.mxu0 0.0
        %243 = vmatprep.subr.mxu0 0.0
        %244 = vmatpush1.xpose.msra.mxu0 0.0
        %245 = vmatprep.subr.mxu0 0.0
        %246 = vmatpush1.xpose.msra.mxu0 0.0
        %247 = vmatprep.subr.mxu0 0.0
        %248 = vmatpush1.xpose.msra.mxu0 0.0
        %249 = vmatprep.subr.mxu0 0.0
        %250 = vmatpush1.xpose.msra.mxu0 0.0
        %251 = vmatprep.subr.mxu0 0.0
        %252 = vmatpush1.xpose.msra.mxu0 0.0
        %253 = vmatprep.subr.mxu0 0.0
        %254 = vmatpush1.xpose.msra.mxu0 0.0
        %255 = vmatprep.subr.mxu0 0.0
        %256 = vmatpush1.xpose.msra.mxu0 0.0
        %257 = vmatprep.subr.mxu0 0.0
        %258 = vmatpush1.xpose.msra.mxu0 0.0
        %259 = vmatprep.subr.mxu0 0.0
        %260 = vmatpush1.xpose.msra.mxu0 0.0
        %261 = vmatprep.subr.mxu0 0.0
        %262 = vmatpush1.xpose.msra.mxu0 0.0
        %263 = vmatprep.subr.mxu0 0.0
        %264 = vmatpush1.xpose.msra.mxu0 0.0
        %265 = vmatprep.subr.mxu0 0.0
        %266 = vmatpush1.xpose.msra.mxu0 0.0
        %267 = vmatprep.subr.mxu0 0.0
        %268 = vmatpush1.xpose.msra.mxu0 0.0
        %269 = vmatprep.subr.mxu0 0.0
        %270 = vmatpush1.xpose.msra.mxu0 0.0
        %271 = vmatprep.subr.mxu0 0.0
        %272 = vmatpush1.xpose.msra.mxu0 0.0
        %273 = vmatprep.subr.mxu0 0.0
        %274 = vmatpush1.xpose.msra.mxu0 0.0
        %275 = vmatprep.subr.mxu0 0.0
        %276 = vmatpush1.xpose.msra.mxu0 0.0
        %277 = vmatprep.subr.mxu0 0.0
        %278 = vmatpush1.xpose.msra.mxu0 0.0
        %279 = vmatprep.subr.mxu0 0.0
        %280 = vmatpush1.xpose.msra.mxu0 0.0
        %281 = vmatprep.subr.mxu0 0.0
        %282 = vmatpush1.xpose.msra.mxu0 0.0
        %283 = vmatprep.subr.mxu0 0.0
        %284 = vmatpush1.xpose.msra.mxu0 0.0
        %285 = vmatprep.subr.mxu0 0.0
        %286 = vmatpush1.xpose.msra.mxu0 0.0
        %287 = vmatprep.subr.mxu0 0.0
        %288 = vmatpush1.xpose.msra.mxu0 0.0
        %289 = vmatprep.subr.mxu0 0.0
        %290 = vmatpush1.xpose.msra.mxu0 0.0
        %291 = vmatprep.subr.mxu0 0.0
        %292 = vmatpush1.xpose.msra.mxu0 0.0
        %293 = vmatprep.subr.mxu0 0.0
        %294 = vmatpush1.xpose.msra.mxu0 0.0
        %295 = vmatprep.subr.mxu0 0.0
        %296 = vmatpush1.xpose.msra.mxu0 0.0
        %297 = vmatprep.subr.mxu0 0.0
        %298 = vmatpush1.xpose.msra.mxu0 0.0
        %299 = vmatprep.subr.mxu0 0.0
        %300 = vmatpush1.xpose.msra.mxu0 0.0
        %301 = vmatprep.subr.mxu0 0.0
        %302 = vmatpush1.xpose.msra.mxu0 0.0
        %303 = vmatprep.mubr.f32.mxu0 0.0
        %304 = vmatmul.mubr.f32.gmra.mrb[0].mxu0 %v231
        %v305 = vpop.f32.mrb[0].mxu0
        %v306 = vadd.f32 %v222, %v305
        %v307 = vpop.f32.mrb[0].mxu0
        %308 = vmatprep.mubr.f32.mxu0 0.0
        %309 = vmatmul.mubr.f32.gmra.mrb[0].mxu0 %v234
        %v310 = vpop.f32.mrb[0].mxu0
        %v311 = vadd.f32 %v227, %v310
        %v312 = vpop.f32.mrb[0].mxu0
        %313 = vdwg.mxu0
        %vm314 = vcmask 64512
        %315 = vst.msk [vmem:[%s213] sm:$0xff] %vm314, %v306
        %316 = vst.msk [vmem:[%s213 + $0x8] sm:$0xff] %vm314, %v311
        %p317 = scmp.lt.s32.totalorder %s19, 1
        %s318 = scalar_select %p317, %s19, 1
        %p319 = scmp.lt.s32.totalorder %s20, 0
        %s320 = scalar_select %p319, %s20, 0
        %s321 = smul.addr %s318, 2
        %s322 = sadd.s32 %s320, %s321
        %s323 = smul.addr %s322, 8
        %s324 = scalar_lea.vmem %s3, %s323
        // Predicated region
        $region37: #{tpu_custom_call.1} parent=31 // pred_check
          %p325 = pneg %p117
        $region38: #{tpu_custom_call.1} parent=31 // pred_check_branch
          %327 = sbr.rel (%p325) target = $region40
        $region39: #{tpu_custom_call.1} parent=31 // pred_region
          _
        $region40: #{tpu_custom_call.1} parent=31 // pred_fallthru
          _
      $region32: #{tpu_custom_call.1} parent=5 // pred_fallthru
        _
      %p328 = scmp.le.s32.totalorder 2, %s10
      // Predicated region
      $region41: #{tpu_custom_call.1} parent=5 // pred_check
        %p329 = pneg %p328
      $region42: #{tpu_custom_call.1} parent=5 // pred_check_branch
        %331 = sbr.rel (%p329) target = $region44
      $region43: #{tpu_custom_call.1} parent=5 // pred_region
        %s332 = ssub.s32 %s10, 2
        // Predicated region
        $region45: #{tpu_custom_call.1} parent=43 // pred_check
          %p333 = pneg %p123
        $region46: #{tpu_custom_call.1} parent=43 // pred_check_branch
          %335 = sbr.rel (%p333) target = $region48
        $region47: #{tpu_custom_call.1} parent=43 // pred_region
          %p336 = scmp.lt.s32.totalorder %s21, 1
          %s337 = scalar_select %p336, %s21, 1
          %p338 = scmp.lt.s32.totalorder %s22, 0
          %s339 = scalar_select %p338, %s22, 0
          %s340 = smul.addr %s337, 2
          %s341 = sadd.s32 %s339, %s340
          %s342 = smul.addr %s341, 8
          %s343 = scalar_lea.vmem %s3, %s342
        $region48: #{tpu_custom_call.1} parent=43 // pred_fallthru
          _
      $region44: #{tpu_custom_call.1} parent=5 // pred_fallthru
        _
    $region6: #{tpu_custom_call.1} parent=1 // loop_footer
      %s14 = sadd.s32 1, %s10
    $region7: #{tpu_custom_call.1} parent=1 // loop_footer_branch
      %9 = sbr.rel target = $region3
    $region8: #{tpu_custom_call.1} parent=1 // loop_exit
      _
    %344 = vsyncpa [#allocation3], 1
    %s345 = scalar_lea.sflag [#allocation3], 1
    %346 = vsyncpa %s345, 1

</llo_original>
